<compile_context>
chip_gen: v7x
topology: tpu7x:2x2x1
jax: 0.10.0
libtpu: 0.0.40
codegen_flags: <defaults>
</compile_context>

<pallas_src>
import functools

import jax
import jax.numpy as jnp
from jax.experimental import pallas as pl
from jax.experimental.pallas import tpu as pltpu


# ------------------------- atomic line data (class line) -------------------------
def line_params(cw=8542):
    if cw == 8542:
        j1, j2, g1, g2, cwl = 2.5, 1.5, 1.2, 1.33, 8542.091
    elif cw == 6301:
        j1, j2, g1, g2, cwl = 2.0, 2.0, 1.84, 1.5, 6301.4995
    elif cw == 6302:
        j1, j2, g1, g2, cwl = 1.0, 0.0, 2.49, 0.0, 6302.4931
    else:
        raise ValueError("line not implemented in this script")
    d = j1 * (j1 + 1.0) - j2 * (j2 + 1.0)
    geff = 0.5 * (g1 + g2) + 0.25 * (g1 - g2) * d
    ss = j1 * (j1 + 1.0) + j2 * (j2 + 1.0)
    dd = d
    gd = g1 - g2
    Gg = geff * geff - 0.0125 * gd * gd * (16.0 * ss - 7.0 * dd * dd - 4.0)
    return cwl, geff, Gg


# ------------- cder: centered derivative of Stokes I (transposed output) -------------
def cder_jax_T(x, y):
    """x: (nlam,) wavelengths; y: (ny, nx, nStokes, nlam).
    Returns dI/dlambda already in the lane-dense kernel layout: (nlam, ny*nx) f32."""
    I = y[:, :, 0, :]                            # (ny, nx, nlam)
    I = I.reshape(-1, I.shape[-1]).T             # (nlam, N)
    dx = (x[1:] - x[:-1])[:, None]               # (nlam-1, 1)
    d = (I[1:, :] - I[:-1, :]) / dx              # forward diffs, (nlam-1, N)
    # interior[ii] = (dx[ii-1]*d[ii] + dx[ii]*d[ii-1]) / (dx[ii] + dx[ii-1])
    interior = (dx[:-1] * d[1:, :] + dx[1:] * d[:-1, :]) / (dx[1:] + dx[:-1])
    yp = jnp.concatenate([d[:1, :], interior, d[-1:, :]], axis=0)
    return yp.astype(jnp.float32)


# ------------------------- Pallas kernel (hot path) -------------------------
def _wfa_kernel(scl_ref, params_ref, dIdw_ref, q_ref, u_ref, v_ref, *, cv, cqu):
    # scl_ref:    (nWav, 1)  per-wavelength scale, already carries 0.75*C^2*Gg
    # params_ref: (3, tn)    [Blos; BQ; BU] raw params, pixels on lanes
    # dIdw_ref:   (nWav, tn) dI/dlambda, lane-dense
    blos = params_ref[0:1, :] * cv        # (1, tn)  cv = C*geff*Vnorm
    bq = params_ref[1:2, :] * cqu         # (1, tn)  cqu = QUnorm
    bu = params_ref[2:3, :] * cqu

    dIdw = dIdw_ref[...]                  # (nWav, tn)
    dIdwscl = dIdw * scl_ref[...]         # lane-broadcast of (nWav, 1)

    v_ref[...] = blos * dIdw              # sublane-broadcast of (1, tn)
    q_ref[...] = bq * dIdwscl
    u_ref[...] = bu * dIdwscl


def _round_up(x, m):
    return (x + m - 1) // m * m


def wfa_forward(params, dIdw_T, scl, *, C, geff, Gg, Vnorm=1.0, QUnorm=1000.0,
                tn=16384, module_layout=False):
    """params: (N, 3) f32 (module layout); dIdw_T: (nWav, N) f32; scl: (nWav,) f32.

    Returns (stokesQ, stokesU, stokesV) in the lane-dense (nWav, N) layout by
    default (values identical to the module); module_layout=True transposes
    back to the module's (N, nWav)."""
    nWav, N = dIdw_T.shape
    assert params.shape == (N, 3)

    # Fold the Q/U prefactor into the tiny per-wavelength scale vector so no
    # full-tile constant multiply remains in the kernel.
    scl_eff = ((0.75 * C * C * Gg) * scl.astype(jnp.float32)).reshape(nWav, 1)

    # (3, N) params: tiny layout plumbing (3*N*4 bytes) for lane-dense access.
    params_T = params.astype(jnp.float32).T

    # Lane-dense tile along the pixel axis; pad N to a tile multiple if needed.
    tn_eff = min(int(tn), _round_up(N, 128))
    N_pad = _round_up(N, tn_eff)
    if N_pad != N:
        pad = N_pad - N
        dIdw_T = jnp.pad(dIdw_T, ((0, 0), (0, pad)))
        params_T = jnp.pad(params_T, ((0, 0), (0, pad)))

    kernel = functools.partial(
        _wfa_kernel,
        cv=float(C * geff * Vnorm),
        cqu=float(QUnorm),
    )

    out_sds = jax.ShapeDtypeStruct((nWav, N_pad), jnp.float32)
    grid = (N_pad // tn_eff,)

    spec_wav = pl.BlockSpec((nWav, tn_eff), lambda i: (0, i))
    spec_par = pl.BlockSpec((3, tn_eff), lambda i: (0, i))
    spec_scl = pl.BlockSpec((nWav, 1), lambda i: (0, 0))

    cost = pl.CostEstimate(
        flops=5 * N_pad * nWav + 3 * N_pad,
        transcendentals=0,
        bytes_accessed=4 * (4 * N_pad * nWav + 3 * N_pad + nWav),
    )

    q, u, v = pl.pallas_call(
        kernel,
        out_shape=(out_sds, out_sds, out_sds),
        grid_spec=pltpu.PrefetchScalarGridSpec(
            num_scalar_prefetch=0,
            grid=grid,
            in_specs=[spec_scl, spec_par, spec_wav],
            out_specs=[spec_wav, spec_wav, spec_wav],
        ),
        compiler_params=pltpu.CompilerParams(
            dimension_semantics=("parallel",),
            vmem_limit_bytes=32 * 1024 * 1024,
        ),
        cost_estimate=cost,
    )(scl_eff, params_T, dIdw_T)

    if N_pad != N:
        q, u, v = q[:, :N], u[:, :N], v[:, :N]
    if module_layout:
        q, u, v = q.T, u.T, v.T
    return q, u, v


# ------------------------- pure-JAX reference (module semantics) -------------------------
def wfa_forward_ref(params, dIdw, dIdwscl, *, C, geff, Gg, Vnorm=1.0, QUnorm=1000.0):
    Blos = params[:, 0] * Vnorm
    BQ = params[:, 1] * QUnorm
    BU = params[:, 2] * QUnorm
    stokesV = C * geff * Blos[:, None] * dIdw
    Clp = 0.75 * C * C * Gg * dIdwscl
    stokesQ = Clp * BQ[:, None]
    stokesU = Clp * BU[:, None]
    return stokesQ, stokesU, stokesV


if __name__ == "__main__":
    key = jax.random.PRNGKey(0)
    k_data, k_params = jax.random.split(key)

    # Small synthetic shapes consistent with the module: data (ny, nx, 4, nWav)
    ny, nx, nStokes, nWav = 16, 16, 4, 16
    N = ny * nx
    vdop = 0.035

    data = jax.random.normal(k_data, (ny, nx, nStokes, nWav), dtype=jnp.float32)
    wl = jnp.linspace(-0.8, 0.8, nWav, dtype=jnp.float32)  # relative wavelength grid

    cw, geff, Gg = line_params(8542)
    C = -4.67e-13 * cw ** 2

    # Module __init__ precomputation (one-time JAX glue), emitted lane-dense:
    dIdw_T = cder_jax_T(wl, data)                               # (nWav, N)
    scl = 1.0 / (wl + 1e-9)                                     # module semantics
    scl = jnp.where(jnp.abs(wl) <= vdop, 0.0, scl).astype(jnp.float32)

    # forward() input: params (N, 3)
    params = jax.random.normal(k_params, (N, 3), dtype=jnp.float32)

    q, u, v = wfa_forward(params, dIdw_T, scl, C=C, geff=geff, Gg=Gg)
    jax.block_until_ready((q, u, v))

    # Verify against pure-JAX reference in the original module layout.
    dIdw = dIdw_T.T                                             # (N, nWav)
    dIdwscl = dIdw * scl[None, :]
    q_ref, u_ref, v_ref = wfa_forward_ref(params, dIdw, dIdwscl, C=C, geff=geff, Gg=Gg)

    assert jnp.allclose(q.T, q_ref, rtol=1e-4, atol=1e-8)
    assert jnp.allclose(u.T, u_ref, rtol=1e-4, atol=1e-8)
    assert jnp.allclose(v.T, v_ref, rtol=1e-4, atol=1e-8)

    print("KERNEL_OK")
</pallas_src>

<mosaic_0001>
module attributes {stable_mosaic.version = 11 : i64} {
  func.func @_wfa_kernel(%arg0: i32, %arg1: memref<16x1xf32, #tpu.memory_space<vmem>>, %arg2: memref<3x256xf32, #tpu.memory_space<vmem>>, %arg3: memref<16x256xf32, #tpu.memory_space<vmem>>, %arg4: memref<16x256xf32, #tpu.memory_space<vmem>>, %arg5: memref<16x256xf32, #tpu.memory_space<vmem>>, %arg6: memref<16x256xf32, #tpu.memory_space<vmem>>) attributes {dimension_semantics = [#tpu.dimension_semantics<parallel>], iteration_bounds = array<i64: 1>, scalar_prefetch = 0 : i64, scratch_operands = 0 : i64, tpu.core_type = #tpu.core_type<tc>, window_params = [{pipeline_mode = #tpu.pipeline_mode<synchronous>, transform_indices = @transform_0, window_bounds = array<i64: 16, 1>}, {transform_indices = @transform_1, window_bounds = array<i64: 3, 256>}, {transform_indices = @transform_2, window_bounds = array<i64: 16, 256>}, {transform_indices = @transform_3, window_bounds = array<i64: 16, 256>}, {transform_indices = @transform_4, window_bounds = array<i64: 16, 256>}, {transform_indices = @transform_5, window_bounds = array<i64: 16, 256>}]} {
    %c0 = arith.constant 0 : index
    %c0_0 = arith.constant 0 : index
    %0 = vector.load %arg2[%c0, %c0_0] : memref<3x256xf32, #tpu.memory_space<vmem>>, vector<1x256xf32>
    %cst = arith.constant -3.756850e-05 : f32
    %1 = vector.broadcast %cst : f32 to vector<1x256xf32>
    %2 = arith.mulf %0, %1 : vector<1x256xf32>
    %c1 = arith.constant 1 : index
    %c0_1 = arith.constant 0 : index
    %3 = vector.load %arg2[%c1, %c0_1] : memref<3x256xf32, #tpu.memory_space<vmem>>, vector<1x256xf32>
    %cst_2 = arith.constant 1.000000e+03 : f32
    %4 = vector.broadcast %cst_2 : f32 to vector<1x256xf32>
    %5 = arith.mulf %3, %4 : vector<1x256xf32>
    %c2 = arith.constant 2 : index
    %c0_3 = arith.constant 0 : index
    %6 = vector.load %arg2[%c2, %c0_3] : memref<3x256xf32, #tpu.memory_space<vmem>>, vector<1x256xf32>
    %cst_4 = arith.constant 1.000000e+03 : f32
    %7 = vector.broadcast %cst_4 : f32 to vector<1x256xf32>
    %8 = arith.mulf %6, %7 : vector<1x256xf32>
    %c0_5 = arith.constant 0 : index
    %c0_6 = arith.constant 0 : index
    %9 = vector.load %arg3[%c0_5, %c0_6] : memref<16x256xf32, #tpu.memory_space<vmem>>, vector<16x256xf32>
    %c0_7 = arith.constant 0 : index
    %c0_8 = arith.constant 0 : index
    %10 = vector.load %arg1[%c0_7, %c0_8] : memref<16x1xf32, #tpu.memory_space<vmem>>, vector<16x1xf32>
    %11 = vector.broadcast %10 : vector<16x1xf32> to vector<16x256xf32>
    %12 = arith.mulf %9, %11 : vector<16x256xf32>
    %13 = vector.broadcast %2 : vector<1x256xf32> to vector<16x256xf32>
    %14 = arith.mulf %13, %9 : vector<16x256xf32>
    %c0_9 = arith.constant 0 : index
    %c0_10 = arith.constant 0 : index
    %15 = vector.load %arg6[%c0_9, %c0_10] : memref<16x256xf32, #tpu.memory_space<vmem>>, vector<16x256xf32>
    tpu.vector_store %arg6[%c0_9, %c0_10], %14 {strides = array<i32>} : memref<16x256xf32, #tpu.memory_space<vmem>>, vector<16x256xf32>,
    %16 = vector.broadcast %5 : vector<1x256xf32> to vector<16x256xf32>
    %17 = arith.mulf %16, %12 : vector<16x256xf32>
    %c0_11 = arith.constant 0 : index
    %c0_12 = arith.constant 0 : index
    %18 = vector.load %arg4[%c0_11, %c0_12] : memref<16x256xf32, #tpu.memory_space<vmem>>, vector<16x256xf32>
    tpu.vector_store %arg4[%c0_11, %c0_12], %17 {strides = array<i32>} : memref<16x256xf32, #tpu.memory_space<vmem>>, vector<16x256xf32>,
    %19 = vector.broadcast %8 : vector<1x256xf32> to vector<16x256xf32>
    %20 = arith.mulf %19, %12 : vector<16x256xf32>
    %c0_13 = arith.constant 0 : index
    %c0_14 = arith.constant 0 : index
    %21 = vector.load %arg5[%c0_13, %c0_14] : memref<16x256xf32, #tpu.memory_space<vmem>>, vector<16x256xf32>
    tpu.vector_store %arg5[%c0_13, %c0_14], %20 {strides = array<i32>} : memref<16x256xf32, #tpu.memory_space<vmem>>, vector<16x256xf32>,
    return
  }
  func.func @transform_0(%arg0: i32) -> (i32, i32) {
    %c0_i32 = arith.constant 0 : i32
    %c0_i32_0 = arith.constant 0 : i32
    %c0_i32_1 = arith.constant 0 : i32
    return %c0_i32, %c0_i32_0 : i32, i32
  }
  func.func @transform_1(%arg0: i32) -> (i32, i32) {
    %c0_i32 = arith.constant 0 : i32
    %c0_i32_0 = arith.constant 0 : i32
    return %c0_i32, %arg0 : i32, i32
  }
  func.func @transform_2(%arg0: i32) -> (i32, i32) {
    %c0_i32 = arith.constant 0 : i32
    %c0_i32_0 = arith.constant 0 : i32
    return %c0_i32, %arg0 : i32, i32
  }
  func.func @transform_3(%arg0: i32) -> (i32, i32) {
    %c0_i32 = arith.constant 0 : i32
    %c0_i32_0 = arith.constant 0 : i32
    return %c0_i32, %arg0 : i32, i32
  }
  func.func @transform_4(%arg0: i32) -> (i32, i32) {
    %c0_i32 = arith.constant 0 : i32
    %c0_i32_0 = arith.constant 0 : i32
    return %c0_i32, %arg0 : i32, i32
  }
  func.func @transform_5(%arg0: i32) -> (i32, i32) {
    %c0_i32 = arith.constant 0 : i32
    %c0_i32_0 = arith.constant 0 : i32
    return %c0_i32, %arg0 : i32, i32
  }
}

</mosaic_0001>

<llo_original>
// kernel: tpu_custom_call.1
$region0: #{tpu_custom_call.1}
  #allocation0 [shape = 'u32[]', space=smem, size = 0x4, offset = 0x4, fixed_abs, tag = 'smem constant byte address 0x4 - core index']
  #allocation1 [shape = 'u32[144,128]{1,0:T(1,128)}', space=vmem, size = 0x12000, scoped, tag = 'internal scratch']
  %s0 = inlined_call_operand.vmem [shape: f32[16,1], index: 0, kind: input, shape index: {}]
  %s1 = inlined_call_operand.vmem [shape: f32[3,256], index: 1, kind: input, shape index: {}]
  %s2 = inlined_call_operand.hbm [shape: f32[16,256], index: 2, kind: input, shape index: {}]
  %s3 = inlined_call_operand.hbm [shape: f32[16,256], index: 3, kind: output, shape index: {0}]
  %s4 = inlined_call_operand.hbm [shape: f32[16,256], index: 4, kind: output, shape index: {1}]
  %s5 = inlined_call_operand.hbm [shape: f32[16,256], index: 5, kind: output, shape index: {2}]
  %6 = xla_tuple %s3, %s4, %s5
  %s7 = sld [smem:[#allocation0]]
  $region42: #{tpu_custom_call.1} parent=0
    _
  %s9 = ssub.s32 1, %s7
  %s10 = scalar_select 0, %s9, %s7
  $region1: #{tpu_custom_call.1} parent=0
    #allocation2 [shape = 'u8[16384]{0}', space=vmem, size = 0x4000, scoped, tag = 'input window, operand 2, single buffered']
    #allocation3 [shape = 's32[1]{0}', space=sflag, size = 0x4, scoped, tag = 'scoped memory for tpu_custom_call.1']
    #allocation4 [shape = 's32[1]{0}', space=sflag, size = 0x4, scoped, tag = 'scoped memory for tpu_custom_call.1']
    #allocation5 [shape = 'u8[16384]{0}', space=vmem, size = 0x4000, scoped, tag = 'output window, operand 0, single buffered']
    #allocation6 [shape = 'u8[16384]{0}', space=vmem, size = 0x4000, scoped, tag = 'output window, operand 1, single buffered']
    #allocation7 [shape = 's32[1]{0}', space=sflag, size = 0x4, scoped, tag = 'scoped memory for tpu_custom_call.1']
    #allocation8 [shape = 'u8[16384]{0}', space=vmem, size = 0x4000, scoped, tag = 'output window, operand 2, single buffered']
    %11 = vsyncpa [#allocation3], 0
    %12 = vsyncpa [#allocation4], 0
    %13 = vsyncpa [#allocation7], 0
    // Predicated region
    $region2: #{tpu_custom_call.1} parent=1 // pred_check
      _
    $region3: #{tpu_custom_call.1} parent=1 // pred_check_branch
      %15 = sbr.rel (0) target = $region5
    $region4: #{tpu_custom_call.1} parent=1 // pred_region
      _
    $region5: #{tpu_custom_call.1} parent=1 // pred_fallthru
      _
    // Predicated region
    $region6: #{tpu_custom_call.1} parent=1 // pred_check
      _
    $region7: #{tpu_custom_call.1} parent=1 // pred_check_branch
      %17 = sbr.rel (0) target = $region9
    $region8: #{tpu_custom_call.1} parent=1 // pred_region
      _
    $region9: #{tpu_custom_call.1} parent=1 // pred_fallthru
      _
    // Predicated region
    $region10: #{tpu_custom_call.1} parent=1 // pred_check
      _
    $region11: #{tpu_custom_call.1} parent=1 // pred_check_branch
      %19 = sbr.rel (0) target = $region13
    $region12: #{tpu_custom_call.1} parent=1 // pred_region
      %s21 = ssub.s32 512, 512
      %22 = vsyncadd [#allocation3], %s21
      %s23 = sshll.u32 [#allocation2], 4
      %s24 = int_to_ptr.vmem [resolvable:$true] %s23
      %29 = dma.hbm_to_vmem [thread:$0]  %s2, 512, %s24, [#allocation3], 256, 256, 16
    $region13: #{tpu_custom_call.1} parent=1 // pred_fallthru
      _
    // Predicated region
    $region14: #{tpu_custom_call.1} parent=1 // pred_check
      _
    $region15: #{tpu_custom_call.1} parent=1 // pred_check_branch
      %31 = sbr.rel (0) target = $region17
    $region16: #{tpu_custom_call.1} parent=1 // pred_region
      %32 = dma.done [#allocation3], 512
    $region17: #{tpu_custom_call.1} parent=1 // pred_fallthru
      _
    %v33 = vld [vmem:[%s1] ss:$4 sm:$0x3]
    %v34 = vmul.f32 %v33, -3.75685e-05
    %s35 = scalar_lea.vmem %s1, 1
    %v36 = vld [vmem:[%s35] ss:$4 sm:$0x3]
    %v37 = vmul.f32 %v36, 1000.0
    %s38 = scalar_lea.vmem %s1, 2
    %v39 = vld [vmem:[%s38] ss:$4 sm:$0x3]
    %v40 = vmul.f32 %v39, 1000.0
    %v41 = vld [vmem:[#allocation2] sm:$0xff]
    %v42 = vld [vmem:[#allocation2 + $0x8] sm:$0xff]
    %v43 = vld [vmem:[#allocation2 + $0x10] sm:$0xff]
    %v44 = vld [vmem:[#allocation2 + $0x18] sm:$0xff]
    %v45 = vld [vmem:[%s0] sm:$0xff]
    %v46 = vld [vmem:[%s0 + $0x8] sm:$0xff]
    %48 = vset.pattern.permute.xlu0 0
    %49 = vperm.xlu0 %48, %v45
    %v50 = vpop.permute.xlu0 %49
    %53 = vset.pattern.permute.xlu0 0
    %54 = vperm.xlu0 %53, %v46
    %v55 = vpop.permute.xlu0 %54
    %v57 = vmul.f32 %v41, %v50
    %v58 = vmul.f32 %v42, %v50
    %v59 = vmul.f32 %v43, %v55
    %v60 = vmul.f32 %v44, %v55
    %v62 = vlaneseq
    %v63 = vshrl.u32 %v62, 7
    %v64 = vsub.s32 0, %v63
    %v65 = vrot.slane %v34, %v64
    %v66 = vlaneseq
    %v67 = vshrl.u32 %v66, 7
    %v68 = vsub.s32 1, %v67
    %v69 = vrot.slane %v34, %v68
    %v72 = vmul.f32 %v65, %v41
    %v73 = vmul.f32 %v69, %v42
    %v74 = vmul.f32 %v65, %v43
    %v75 = vmul.f32 %v69, %v44
    %76 = vst [vmem:[#allocation8] sm:$0xff] %v72
    %77 = vst [vmem:[#allocation8 + $0x8] sm:$0xff] %v73
    %78 = vst [vmem:[#allocation8 + $0x10] sm:$0xff] %v74
    %79 = vst [vmem:[#allocation8 + $0x18] sm:$0xff] %v75
    %v81 = vlaneseq
    %v82 = vshrl.u32 %v81, 7
    %v83 = vsub.s32 0, %v82
    %v84 = vrot.slane %v37, %v83
    %v85 = vlaneseq
    %v86 = vshrl.u32 %v85, 7
    %v87 = vsub.s32 1, %v86
    %v88 = vrot.slane %v37, %v87
    %v91 = vmul.f32 %v84, %v57
    %v92 = vmul.f32 %v88, %v58
    %v93 = vmul.f32 %v84, %v59
    %v94 = vmul.f32 %v88, %v60
    %95 = vst [vmem:[#allocation5] sm:$0xff] %v91
    %96 = vst [vmem:[#allocation5 + $0x8] sm:$0xff] %v92
    %97 = vst [vmem:[#allocation5 + $0x10] sm:$0xff] %v93
    %98 = vst [vmem:[#allocation5 + $0x18] sm:$0xff] %v94
    %v100 = vlaneseq
    %v101 = vshrl.u32 %v100, 7
    %v102 = vsub.s32 0, %v101
    %v103 = vrot.slane %v40, %v102
    %v104 = vlaneseq
    %v105 = vshrl.u32 %v104, 7
    %v106 = vsub.s32 1, %v105
    %v107 = vrot.slane %v40, %v106
    %v110 = vmul.f32 %v103, %v57
    %v111 = vmul.f32 %v107, %v58
    %v112 = vmul.f32 %v103, %v59
    %v113 = vmul.f32 %v107, %v60
    %114 = vst [vmem:[#allocation6] sm:$0xff] %v110
    %115 = vst [vmem:[#allocation6 + $0x8] sm:$0xff] %v111
    %116 = vst [vmem:[#allocation6 + $0x10] sm:$0xff] %v112
    %117 = vst [vmem:[#allocation6 + $0x18] sm:$0xff] %v113
    // Predicated region
    $region18: #{tpu_custom_call.1} parent=1 // pred_check
      _
    $region19: #{tpu_custom_call.1} parent=1 // pred_check_branch
      %119 = sbr.rel (0) target = $region21
    $region20: #{tpu_custom_call.1} parent=1 // pred_region
      %s121 = ssub.s32 512, 512
      %122 = vsyncadd [#allocation4], %s121
      %s123 = sshll.u32 [#allocation5], 4
      %s124 = int_to_ptr.vmem [resolvable:$true] %s123
      %129 = dma.vmem_to_hbm [thread:$0]  %s124, 512, %s3, [#allocation4], 256, 256, 16
    $region21: #{tpu_custom_call.1} parent=1 // pred_fallthru
      _
    // Predicated region
    $region22: #{tpu_custom_call.1} parent=1 // pred_check
      _
    $region23: #{tpu_custom_call.1} parent=1 // pred_check_branch
      %131 = sbr.rel (0) target = $region25
    $region24: #{tpu_custom_call.1} parent=1 // pred_region
      %s133 = ssub.s32 512, 512
      %134 = vsyncadd [#allocation7], %s133
      %s135 = sshll.u32 [#allocation6], 4
      %s136 = int_to_ptr.vmem [resolvable:$true] %s135
      %141 = dma.vmem_to_hbm [thread:$0]  %s136, 512, %s4, [#allocation7], 256, 256, 16
    $region25: #{tpu_custom_call.1} parent=1 // pred_fallthru
      _
    // Predicated region
    $region26: #{tpu_custom_call.1} parent=1 // pred_check
      _
    $region27: #{tpu_custom_call.1} parent=1 // pred_check_branch
      %143 = sbr.rel (0) target = $region29
    $region28: #{tpu_custom_call.1} parent=1 // pred_region
      %s145 = ssub.s32 512, 512
      %146 = vsyncadd [#allocation7], %s145
      %s147 = sshll.u32 [#allocation8], 4
      %s148 = int_to_ptr.vmem [resolvable:$true] %s147
      %153 = dma.vmem_to_hbm [thread:$0]  %s148, 512, %s5, [#allocation7], 256, 256, 16
    $region29: #{tpu_custom_call.1} parent=1 // pred_fallthru
      _
    // Predicated region
    $region30: #{tpu_custom_call.1} parent=1 // pred_check
      _
    $region31: #{tpu_custom_call.1} parent=1 // pred_check_branch
      %155 = sbr.rel (0) target = $region33
    $region32: #{tpu_custom_call.1} parent=1 // pred_region
      %156 = dma.done [#allocation4], 512
    $region33: #{tpu_custom_call.1} parent=1 // pred_fallthru
      _
    // Predicated region
    $region34: #{tpu_custom_call.1} parent=1 // pred_check
      _
    $region35: #{tpu_custom_call.1} parent=1 // pred_check_branch
      %158 = sbr.rel (0) target = $region37
    $region36: #{tpu_custom_call.1} parent=1 // pred_region
      %159 = dma.done [#allocation7], 512
    $region37: #{tpu_custom_call.1} parent=1 // pred_fallthru
      _
    // Predicated region
    $region38: #{tpu_custom_call.1} parent=1 // pred_check
      _
    $region39: #{tpu_custom_call.1} parent=1 // pred_check_branch
      %161 = sbr.rel (0) target = $region41
    $region40: #{tpu_custom_call.1} parent=1 // pred_region
      %162 = dma.done [#allocation7], 512
    $region41: #{tpu_custom_call.1} parent=1 // pred_fallthru
      _
    %163 = vsyncpa [#allocation3], 1
    %164 = vsyncpa [#allocation4], 1
    %165 = vsyncpa [#allocation7], 1

</llo_original>
